<compile_context>
chip_gen: v6e
topology: v6e:2x2x1
jax: 0.10.0
libtpu: 0.0.40
codegen_flags: <defaults>
</compile_context>

<pallas_src>
import functools

import jax
import jax.numpy as jnp
from jax.experimental import pallas as pl
from jax.experimental.pallas import tpu as pltpu


def _cdiv(a, b):
    return -(-a // b)


def _iou_partial_kernel(pred_ref, target_ref, out_tp_ref, out_s_ref,
                        acc_tp_ref, acc_s_ref, *,
                        n_valid, tile_n, tiles_per_part, needs_mask):
    """Accumulate per-sample sum(t*p) and sum(t+p) over tiles of the N axis."""
    k = pl.program_id(1)

    @pl.when(k == 0)
    def _():
        acc_tp_ref[...] = jnp.zeros_like(acc_tp_ref)
        acc_s_ref[...] = jnp.zeros_like(acc_s_ref)

    # Native-dtype DMA; accumulate in f32.
    p = pred_ref[...].astype(jnp.float32)
    t = target_ref[...].astype(jnp.float32)

    prod = t * p          # -> Iand
    both = t + p          # -> sum(t) + sum(p); Ior = both - Iand

    if needs_mask:
        part = pl.program_id(0)
        tile = part * tiles_per_part + k          # logical tile id
        start = tile * tile_n
        col = jax.lax.broadcasted_iota(jnp.int32, prod.shape, 1)
        valid = (start + col) < n_valid
        prod = jnp.where(valid, prod, 0.0)
        both = jnp.where(valid, both, 0.0)

    # Two cross-lane reductions per tile (was three).
    acc_tp_ref[...] += jnp.sum(prod, axis=-1, keepdims=True)
    acc_s_ref[...] += jnp.sum(both, axis=-1, keepdims=True)

    @pl.when(k == pl.num_programs(1) - 1)
    def _():
        b = acc_tp_ref.shape[0]
        out_tp_ref[...] = acc_tp_ref[...].reshape(1, b, 1)
        out_s_ref[...] = acc_s_ref[...].reshape(1, b, 1)


def iou_loss(pred, target, *, tile_n=None):
    """Pallas implementation of the IOU module forward pass.

    pred, target: (B, C, H, W) float arrays (NCHW, same as PyTorch).
    Returns a scalar float32 loss.  `tile_n` optionally overrides the
    reduction tile width (must be a multiple of 128, or >= N).
    """
    assert pred.shape == target.shape
    B = pred.shape[0]
    p2 = pred.reshape(B, -1)
    t2 = target.reshape(B, -1)
    N = p2.shape[1]
    itemsize = max(p2.dtype.itemsize, t2.dtype.itemsize)

    # ---- tile-size selection: ~2 MiB per input block -> 2 inputs x 2
    # pipeline buffers stays < 8-9 MiB, safe on v5e/v6e/v7x defaults. ----
    if tile_n is None:
        budget_bytes = 2 * 1024 * 1024
        tn = budget_bytes // max(1, B * itemsize)
        tn = max(128, (tn // 128) * 128)
    else:
        tn = int(tile_n)
        assert tn % 128 == 0 or tn >= N, "tile_n must be a multiple of 128"
    if tn >= N:
        tn = N                       # single full-width tile (full-dim block)

    n_tiles = _cdiv(N, tn)
    num_parts = 2 if n_tiles >= 2 else 1      # v7x: one half per TensorCore
    tiles_per_part = _cdiv(n_tiles, num_parts)
    needs_mask = (num_parts * tiles_per_part * tn) != N
    exact_cover = (num_parts * tiles_per_part) == n_tiles
    last_tile = n_tiles - 1

    if exact_cover:
        def in_index_map(part, k):
            return (0, part * tiles_per_part + k)
    else:
        # Surplus grid steps re-read the last real tile; their lanes are
        # fully masked in-kernel, so they contribute zero.
        def in_index_map(part, k):
            return (0, jnp.minimum(part * tiles_per_part + k, last_tile))

    kernel = functools.partial(
        _iou_partial_kernel,
        n_valid=N,
        tile_n=tn,
        tiles_per_part=tiles_per_part,
        needs_mask=needs_mask,
    )

    out_tp, out_s = pl.pallas_call(
        kernel,
        out_shape=(
            jax.ShapeDtypeStruct((num_parts, B, 1), jnp.float32),
            jax.ShapeDtypeStruct((num_parts, B, 1), jnp.float32),
        ),
        grid_spec=pltpu.PrefetchScalarGridSpec(
            num_scalar_prefetch=0,
            grid=(num_parts, tiles_per_part),
            in_specs=[
                pl.BlockSpec((B, tn), in_index_map),
                pl.BlockSpec((B, tn), in_index_map),
            ],
            out_specs=[
                pl.BlockSpec((1, B, 1), lambda part, k: (part, 0, 0)),
                pl.BlockSpec((1, B, 1), lambda part, k: (part, 0, 0)),
            ],
            scratch_shapes=[
                pltpu.VMEM((B, 1), jnp.float32),   # running sum(t*p)
                pltpu.VMEM((B, 1), jnp.float32),   # running sum(t+p)
            ],
        ),
        compiler_params=pltpu.CompilerParams(
            dimension_semantics=("parallel", "arbitrary")),
    )(p2, t2)

    # Tiny epilogue in plain JAX: combine the per-part partial sums.
    iand = jnp.sum(out_tp, axis=0)[:, 0]      # (B,)
    both = jnp.sum(out_s, axis=0)[:, 0]       # (B,)  = sum(t) + sum(p)
    ior = both - iand
    loss = jnp.mean(1.0 - iand / ior)
    return loss.astype(jnp.float32)


def _iou_ref(pred, target):
    """Pure-JAX reference mirroring the PyTorch loop."""
    B = pred.shape[0]
    p = pred.reshape(B, -1).astype(jnp.float32)
    t = target.reshape(B, -1).astype(jnp.float32)
    iand = jnp.sum(t * p, axis=-1)
    ior = jnp.sum(t, axis=-1) + jnp.sum(p, axis=-1) - iand
    return jnp.sum(1.0 - iand / ior) / B


if __name__ == "__main__":
    key = jax.random.PRNGKey(0)
    k1, k2, k3, k4, k5, k6 = jax.random.split(key, 6)

    # Check 1: default tiling (single tile for this small N).
    B, C, H, W = 2, 4, 16, 16
    pred = jax.random.uniform(k1, (B, C, H, W), dtype=jnp.float32)
    target = (jax.random.uniform(k2, (B, C, H, W)) > 0.5).astype(jnp.float32)
    loss = jax.block_until_ready(iou_loss(pred, target))
    ref = jax.block_until_ready(_iou_ref(pred, target))
    assert jnp.allclose(loss, ref, rtol=1e-5, atol=1e-6), (loss, ref)

    # Check 2: multi-tile + 2-way parallel split + surplus-tile clamp path.
    # N = 3*16*16 = 768, tile_n=256 -> 3 real tiles on a (2, 2) grid.
    pred2 = jax.random.uniform(k3, (2, 3, 16, 16), dtype=jnp.float32)
    target2 = (jax.random.uniform(k4, (2, 3, 16, 16)) > 0.5).astype(jnp.float32)
    loss2 = jax.block_until_ready(iou_loss(pred2, target2, tile_n=256))
    ref2 = jax.block_until_ready(_iou_ref(pred2, target2))
    assert jnp.allclose(loss2, ref2, rtol=1e-5, atol=1e-6), (loss2, ref2)

    # Check 3: partial (masked) tail tile.  N = 5*8*12 = 480, tile_n=128.
    pred3 = jax.random.uniform(k5, (2, 5, 8, 12), dtype=jnp.float32)
    target3 = (jax.random.uniform(k6, (2, 5, 8, 12)) > 0.5).astype(jnp.float32)
    loss3 = jax.block_until_ready(iou_loss(pred3, target3, tile_n=128))
    ref3 = jax.block_until_ready(_iou_ref(pred3, target3))
    assert jnp.allclose(loss3, ref3, rtol=1e-5, atol=1e-6), (loss3, ref3)

    # Check 4: bf16 inputs stream in bf16 and accumulate in f32.
    loss4 = jax.block_until_ready(
        iou_loss(pred2.astype(jnp.bfloat16), target2.astype(jnp.bfloat16),
                 tile_n=256))
    ref4 = jax.block_until_ready(
        _iou_ref(pred2.astype(jnp.bfloat16), target2.astype(jnp.bfloat16)))
    assert jnp.allclose(loss4, ref4, rtol=5e-3, atol=5e-3), (loss4, ref4)

    print("KERNEL_OK")
</pallas_src>

<mosaic_0001>
module attributes {stable_mosaic.version = 11 : i64} {
  func.func @_iou_partial_kernel(%arg0: i32, %arg1: i32, %arg2: memref<2x1024xf32, #tpu.memory_space<vmem>>, %arg3: memref<2x1024xf32, #tpu.memory_space<vmem>>, %arg4: memref<1x2x1xf32, #tpu.memory_space<vmem>>, %arg5: memref<1x2x1xf32, #tpu.memory_space<vmem>>, %arg6: memref<2x1xf32, #tpu.memory_space<vmem>>, %arg7: memref<2x1xf32, #tpu.memory_space<vmem>>) attributes {dimension_semantics = [#tpu.dimension_semantics<parallel>, #tpu.dimension_semantics<arbitrary>], iteration_bounds = array<i64: 1, 1>, scalar_prefetch = 0 : i64, scratch_operands = 2 : i64, tpu.core_type = #tpu.core_type<tc>, window_params = [{transform_indices = @transform_0, window_bounds = array<i64: 2, 1024>}, {transform_indices = @transform_1, window_bounds = array<i64: 2, 1024>}, {transform_indices = @transform_2, window_bounds = array<i64: 1, 2, 1>}, {transform_indices = @transform_3, window_bounds = array<i64: 1, 2, 1>}]} {
    %c0_i32 = arith.constant 0 : i32
    %0 = arith.cmpi eq, %arg1, %c0_i32 : i32
    %1 = arith.extui %0 : i1 to i32
    %c0_i32_0 = arith.constant 0 : i32
    %2 = arith.cmpi ne, %1, %c0_i32_0 : i32
    scf.if %2 {
      %cst_15 = arith.constant 0.000000e+00 : f32
      %20 = vector.broadcast %cst_15 : f32 to vector<2x1xf32>
      %c0_16 = arith.constant 0 : index
      %c0_17 = arith.constant 0 : index
      %21 = vector.load %arg6[%c0_16, %c0_17] : memref<2x1xf32, #tpu.memory_space<vmem>>, vector<2x1xf32>
      tpu.vector_store %arg6[%c0_16, %c0_17], %20 {strides = array<i32>} : memref<2x1xf32, #tpu.memory_space<vmem>>, vector<2x1xf32>,
      %cst_18 = arith.constant 0.000000e+00 : f32
      %22 = vector.broadcast %cst_18 : f32 to vector<2x1xf32>
      %c0_19 = arith.constant 0 : index
      %c0_20 = arith.constant 0 : index
      %23 = vector.load %arg7[%c0_19, %c0_20] : memref<2x1xf32, #tpu.memory_space<vmem>>, vector<2x1xf32>
      tpu.vector_store %arg7[%c0_19, %c0_20], %22 {strides = array<i32>} : memref<2x1xf32, #tpu.memory_space<vmem>>, vector<2x1xf32>,
    } else {
    }
    %c0 = arith.constant 0 : index
    %c0_1 = arith.constant 0 : index
    %3 = vector.load %arg2[%c0, %c0_1] : memref<2x1024xf32, #tpu.memory_space<vmem>>, vector<2x1024xf32>
    %c0_2 = arith.constant 0 : index
    %c0_3 = arith.constant 0 : index
    %4 = vector.load %arg3[%c0_2, %c0_3] : memref<2x1024xf32, #tpu.memory_space<vmem>>, vector<2x1024xf32>
    %5 = arith.mulf %4, %3 : vector<2x1024xf32>
    %6 = arith.addf %4, %3 : vector<2x1024xf32>
    %c0_4 = arith.constant 0 : index
    %c0_5 = arith.constant 0 : index
    %7 = vector.load %arg6[%c0_4, %c0_5] : memref<2x1xf32, #tpu.memory_space<vmem>>, vector<2x1xf32>
    %cst = arith.constant dense<0.000000e+00> : vector<2xf32>
    %8 = vector.multi_reduction <add>, %5, %cst [1] : vector<2x1024xf32> to vector<2xf32>
    %9 = vector.shape_cast %8 : vector<2xf32> to vector<2x1xf32>
    %10 = arith.addf %7, %9 : vector<2x1xf32>
    %c0_6 = arith.constant 0 : index
    %c0_7 = arith.constant 0 : index
    %11 = vector.load %arg6[%c0_6, %c0_7] : memref<2x1xf32, #tpu.memory_space<vmem>>, vector<2x1xf32>
    tpu.vector_store %arg6[%c0_6, %c0_7], %10 {strides = array<i32>} : memref<2x1xf32, #tpu.memory_space<vmem>>, vector<2x1xf32>,
    %c0_8 = arith.constant 0 : index
    %c0_9 = arith.constant 0 : index
    %12 = vector.load %arg7[%c0_8, %c0_9] : memref<2x1xf32, #tpu.memory_space<vmem>>, vector<2x1xf32>
    %cst_10 = arith.constant dense<0.000000e+00> : vector<2xf32>
    %13 = vector.multi_reduction <add>, %6, %cst_10 [1] : vector<2x1024xf32> to vector<2xf32>
    %14 = vector.shape_cast %13 : vector<2xf32> to vector<2x1xf32>
    %15 = arith.addf %12, %14 : vector<2x1xf32>
    %c0_11 = arith.constant 0 : index
    %c0_12 = arith.constant 0 : index
    %16 = vector.load %arg7[%c0_11, %c0_12] : memref<2x1xf32, #tpu.memory_space<vmem>>, vector<2x1xf32>
    tpu.vector_store %arg7[%c0_11, %c0_12], %15 {strides = array<i32>} : memref<2x1xf32, #tpu.memory_space<vmem>>, vector<2x1xf32>,
    %c0_i32_13 = arith.constant 0 : i32
    %17 = arith.cmpi eq, %arg1, %c0_i32_13 : i32
    %18 = arith.extui %17 : i1 to i32
    %c0_i32_14 = arith.constant 0 : i32
    %19 = arith.cmpi ne, %18, %c0_i32_14 : i32
    scf.if %19 {
      %c0_15 = arith.constant 0 : index
      %c0_16 = arith.constant 0 : index
      %20 = vector.load %arg6[%c0_15, %c0_16] : memref<2x1xf32, #tpu.memory_space<vmem>>, vector<2x1xf32>
      %21 = vector.shape_cast %20 : vector<2x1xf32> to vector<1x2x1xf32>
      %c0_17 = arith.constant 0 : index
      %c0_18 = arith.constant 0 : index
      %c0_19 = arith.constant 0 : index
      %22 = vector.load %arg4[%c0_17, %c0_18, %c0_19] : memref<1x2x1xf32, #tpu.memory_space<vmem>>, vector<1x2x1xf32>
      tpu.vector_store %arg4[%c0_17, %c0_18, %c0_19], %21 {strides = array<i32>} : memref<1x2x1xf32, #tpu.memory_space<vmem>>, vector<1x2x1xf32>,
      %c0_20 = arith.constant 0 : index
      %c0_21 = arith.constant 0 : index
      %23 = vector.load %arg7[%c0_20, %c0_21] : memref<2x1xf32, #tpu.memory_space<vmem>>, vector<2x1xf32>
      %24 = vector.shape_cast %23 : vector<2x1xf32> to vector<1x2x1xf32>
      %c0_22 = arith.constant 0 : index
      %c0_23 = arith.constant 0 : index
      %c0_24 = arith.constant 0 : index
      %25 = vector.load %arg5[%c0_22, %c0_23, %c0_24] : memref<1x2x1xf32, #tpu.memory_space<vmem>>, vector<1x2x1xf32>
      tpu.vector_store %arg5[%c0_22, %c0_23, %c0_24], %24 {strides = array<i32>} : memref<1x2x1xf32, #tpu.memory_space<vmem>>, vector<1x2x1xf32>,
    } else {
    }
    return
  }
  func.func @transform_0(%arg0: i32, %arg1: i32) -> (i32, i32) {
    %c1_i32 = arith.constant 1 : i32
    %0 = arith.muli %arg0, %c1_i32 : i32
    %1 = arith.addi %0, %arg1 : i32
    %c0_i32 = arith.constant 0 : i32
    %c0_i32_0 = arith.constant 0 : i32
    return %c0_i32, %1 : i32, i32
  }
  func.func @transform_1(%arg0: i32, %arg1: i32) -> (i32, i32) {
    %c1_i32 = arith.constant 1 : i32
    %0 = arith.muli %arg0, %c1_i32 : i32
    %1 = arith.addi %0, %arg1 : i32
    %c0_i32 = arith.constant 0 : i32
    %c0_i32_0 = arith.constant 0 : i32
    return %c0_i32, %1 : i32, i32
  }
  func.func @transform_2(%arg0: i32, %arg1: i32) -> (i32, i32, i32) {
    %c0_i32 = arith.constant 0 : i32
    %c0_i32_0 = arith.constant 0 : i32
    %c0_i32_1 = arith.constant 0 : i32
    return %arg0, %c0_i32, %c0_i32_0 : i32, i32, i32
  }
  func.func @transform_3(%arg0: i32, %arg1: i32) -> (i32, i32, i32) {
    %c0_i32 = arith.constant 0 : i32
    %c0_i32_0 = arith.constant 0 : i32
    %c0_i32_1 = arith.constant 0 : i32
    return %arg0, %c0_i32, %c0_i32_0 : i32, i32, i32
  }
}

</mosaic_0001>

<llo_original>
// kernel: tpu_custom_call.1
$region0: #{tpu_custom_call.1}
  #allocation0 [shape = 'u32[]', space=smem, size = 0x4, offset = 0x4, fixed_abs, tag = 'smem constant byte address 0x4 - core index']
  #allocation1 [shape = 'u32[144,128]{1,0:T(1,128)}', space=vmem, size = 0x12000, scoped, tag = 'internal scratch']
  #allocation2 [shape = 'f32[2,1]{1,0:T(2,128)}', space=vmem, size = 0x400, scoped, tag = 'scratch operand']
  #allocation3 [shape = 'f32[2,1]{1,0:T(2,128)}', space=vmem, size = 0x400, scoped, tag = 'scratch operand']
  %s0 = inlined_call_operand.hbm [shape: f32[2,1024], index: 0, kind: input, shape index: {}]
  %s1 = inlined_call_operand.hbm [shape: f32[2,1024], index: 1, kind: input, shape index: {}]
  %s2 = inlined_call_operand.vmem [shape: f32[1,2,1], index: 2, kind: output, shape index: {0}]
  %s3 = inlined_call_operand.vmem [shape: f32[1,2,1], index: 3, kind: output, shape index: {1}]
  %4 = xla_tuple %s2, %s3
  %s5 = sld [smem:[#allocation0]]
  $region42: #{tpu_custom_call.1} parent=0
    _
  %s7 = ssub.s32 1, %s5
  %s8 = scalar_select 0, %s7, %s5
  $region1: #{tpu_custom_call.1} parent=0
    #allocation4 [shape = 'u8[8192]{0}', space=vmem, size = 0x2000, scoped, tag = 'input window, operand 0, single buffered']
    #allocation5 [shape = 's32[1]{0}', space=sflag, size = 0x4, scoped, tag = 'scoped memory for tpu_custom_call.1']
    #allocation6 [shape = 'u8[8192]{0}', space=vmem, size = 0x2000, scoped, tag = 'input window, operand 1, single buffered']
    #allocation7 [shape = 's32[1]{0}', space=sflag, size = 0x4, scoped, tag = 'scoped memory for tpu_custom_call.1']
    %9 = vsyncpa [#allocation5], 0
    %10 = vsyncpa [#allocation7], 0
    // Predicated region
    $region2: #{tpu_custom_call.1} parent=1 // pred_check
      _
    $region3: #{tpu_custom_call.1} parent=1 // pred_check_branch
      %12 = sbr.rel (0) target = $region5
    $region4: #{tpu_custom_call.1} parent=1 // pred_region
      %s13 = sadd.s32 0, 0
      %s14 = smul.u32 8, %s13
      %s16 = ssub.s32 256, 256
      %17 = vsyncadd [#allocation5], %s16
      %s18 = smul.addr %s14, 32
      %s19 = scalar_lea.hbm %s0, %s18
      %s21 = sshll.u32 [#allocation4], 4
      %s22 = int_to_ptr.vmem [resolvable:$true] %s21
      %24 = dma.hbm_to_vmem [thread:$0]  %s19, 256, %s22, [#allocation5]
    $region5: #{tpu_custom_call.1} parent=1 // pred_fallthru
      _
    // Predicated region
    $region6: #{tpu_custom_call.1} parent=1 // pred_check
      _
    $region7: #{tpu_custom_call.1} parent=1 // pred_check_branch
      %26 = sbr.rel (0) target = $region9
    $region8: #{tpu_custom_call.1} parent=1 // pred_region
      %s27 = sadd.s32 0, 0
      %s28 = smul.u32 8, %s27
      %s30 = ssub.s32 256, 256
      %31 = vsyncadd [#allocation7], %s30
      %s32 = smul.addr %s28, 32
      %s33 = scalar_lea.hbm %s1, %s32
      %s35 = sshll.u32 [#allocation6], 4
      %s36 = int_to_ptr.vmem [resolvable:$true] %s35
      %38 = dma.hbm_to_vmem [thread:$0]  %s33, 256, %s36, [#allocation7]
    $region9: #{tpu_custom_call.1} parent=1 // pred_fallthru
      _
    // Predicated region
    $region10: #{tpu_custom_call.1} parent=1 // pred_check
      _
    $region11: #{tpu_custom_call.1} parent=1 // pred_check_branch
      %40 = sbr.rel (0) target = $region13
    $region12: #{tpu_custom_call.1} parent=1 // pred_region
      %41 = dma.done [#allocation5], 256
    $region13: #{tpu_custom_call.1} parent=1 // pred_fallthru
      _
    // Predicated region
    $region14: #{tpu_custom_call.1} parent=1 // pred_check
      _
    $region15: #{tpu_custom_call.1} parent=1 // pred_check_branch
      %43 = sbr.rel (0) target = $region17
    $region16: #{tpu_custom_call.1} parent=1 // pred_region
      %44 = dma.done [#allocation7], 256
    $region17: #{tpu_custom_call.1} parent=1 // pred_fallthru
      _
    %s45 = sadd.s32 0, 0
    %s46 = smul.u32 8, %s45
    %s47 = sadd.s32 0, 0
    %s48 = smul.u32 8, %s47
    %p49 = scmp.eq.s32.totalorder 0, 0
    // Predicated region
    $region18: #{tpu_custom_call.1} parent=1 // pred_check
      %p50 = pneg %p49
    $region19: #{tpu_custom_call.1} parent=1 // pred_check_branch
      %52 = sbr.rel (%p50) target = $region21
    $region20: #{tpu_custom_call.1} parent=1 // pred_region
      %vm53 = vcmask 1024
      %54 = vst.msk [vmem:[#allocation2] sm:$0x3] %vm53, 0.0
      %55 = vst.msk [vmem:[#allocation3] sm:$0x3] %vm53, 0.0
    $region21: #{tpu_custom_call.1} parent=1 // pred_fallthru
      _
    %v56 = vld [vmem:[#allocation4] sm:$0xff]
    %v57 = vld [vmem:[#allocation4 + $0x8] sm:$0xff]
    %v58 = vld [vmem:[#allocation6] sm:$0xff]
    %v59 = vld [vmem:[#allocation6 + $0x8] sm:$0xff]
    %v60 = vmul.f32 %v58, %v56
    %v61 = vmul.f32 %v59, %v57
    %v62 = vadd.f32 %v58, %v56
    %v63 = vadd.f32 %v59, %v57
    %v64 = vld [vmem:[#allocation2] sm:$0x3]
    %v67 = vcombine.high %v60, %v60
    %v69 = vunpack.c.l.s4 1983009808
    %v70 = vunpack.c.0.s8 %v69
    %v71 = vlaneseq
    %v72 = vshrl.u32 %v71, 7
    %v73 = vsub.s32 %v70, %v72
    %v74 = vrot.slane %v60, %v73
    %v76 = vunpack.c.l.s4 1983009808
    %v77 = vunpack.c.0.s8 %v76
    %v78 = vlaneseq
    %v79 = vshrl.u32 %v78, 7
    %v80 = vsub.s32 %v77, %v79
    %v81 = vrot.slane %v67, %v80
    %v82 = vcombine.high %v74, %v74
    %v83 = vcombine.high %v81, %v81
    %v84 = vcombine.high %v61, %v61
    %v86 = vunpack.c.l.s4 1983009808
    %v87 = vunpack.c.0.s8 %v86
    %v88 = vlaneseq
    %v89 = vshrl.u32 %v88, 7
    %v90 = vsub.s32 %v87, %v89
    %v91 = vrot.slane %v61, %v90
    %v93 = vunpack.c.l.s4 1983009808
    %v94 = vunpack.c.0.s8 %v93
    %v95 = vlaneseq
    %v96 = vshrl.u32 %v95, 7
    %v97 = vsub.s32 %v94, %v96
    %v98 = vrot.slane %v84, %v97
    %v99 = vcombine.high %v91, %v91
    %v100 = vcombine.high %v98, %v98
    %vm109 = vcmask 1041408
    %v110 = vsel %vm109, %v74, 0.0
    %v111 = vsel %vm109, %v82, 0.0
    %v112 = vadd.f32 %v110, %v111
    %v113 = vsel %vm109, %v81, 0.0
    %v114 = vadd.f32 %v112, %v113
    %v115 = vsel %vm109, %v83, 0.0
    %v116 = vadd.f32 %v114, %v115
    %v117 = vsel %vm109, %v91, 0.0
    %v118 = vadd.f32 %v116, %v117
    %v119 = vsel %vm109, %v99, 0.0
    %v120 = vadd.f32 %v118, %v119
    %v121 = vsel %vm109, %v98, 0.0
    %v122 = vadd.f32 %v120, %v121
    %v123 = vsel %vm109, %v100, 0.0
    %v124 = vadd.f32 %v122, %v123
    %125 = vadd.xlane.f32.xlu0 %v124
    %v126 = vpop.xlane.xlu0 %125
    %v127 = vadd.f32 %v64, %v126
    %vm128 = vcmask 1024
    %129 = vst.msk [vmem:[#allocation2] sm:$0x3] %vm128, %v127
    %v130 = vld [vmem:[#allocation3] sm:$0x3]
    %v133 = vcombine.high %v62, %v62
    %v135 = vunpack.c.l.s4 1983009808
    %v136 = vunpack.c.0.s8 %v135
    %v137 = vlaneseq
    %v138 = vshrl.u32 %v137, 7
    %v139 = vsub.s32 %v136, %v138
    %v140 = vrot.slane %v62, %v139
    %v142 = vunpack.c.l.s4 1983009808
    %v143 = vunpack.c.0.s8 %v142
    %v144 = vlaneseq
    %v145 = vshrl.u32 %v144, 7
    %v146 = vsub.s32 %v143, %v145
    %v147 = vrot.slane %v133, %v146
    %v148 = vcombine.high %v140, %v140
    %v149 = vcombine.high %v147, %v147
    %v150 = vcombine.high %v63, %v63
    %v152 = vunpack.c.l.s4 1983009808
    %v153 = vunpack.c.0.s8 %v152
    %v154 = vlaneseq
    %v155 = vshrl.u32 %v154, 7
    %v156 = vsub.s32 %v153, %v155
    %v157 = vrot.slane %v63, %v156
    %v159 = vunpack.c.l.s4 1983009808
    %v160 = vunpack.c.0.s8 %v159
    %v161 = vlaneseq
    %v162 = vshrl.u32 %v161, 7
    %v163 = vsub.s32 %v160, %v162
    %v164 = vrot.slane %v150, %v163
    %v165 = vcombine.high %v157, %v157
    %v166 = vcombine.high %v164, %v164
    %v175 = vsel %vm109, %v140, 0.0
    %v176 = vsel %vm109, %v148, 0.0
    %v177 = vadd.f32 %v175, %v176
    %v178 = vsel %vm109, %v147, 0.0
    %v179 = vadd.f32 %v177, %v178
    %v180 = vsel %vm109, %v149, 0.0
    %v181 = vadd.f32 %v179, %v180
    %v182 = vsel %vm109, %v157, 0.0
    %v183 = vadd.f32 %v181, %v182
    %v184 = vsel %vm109, %v165, 0.0
    %v185 = vadd.f32 %v183, %v184
    %v186 = vsel %vm109, %v164, 0.0
    %v187 = vadd.f32 %v185, %v186
    %v188 = vsel %vm109, %v166, 0.0
    %v189 = vadd.f32 %v187, %v188
    %190 = vadd.xlane.f32.xlu0 %v189
    %v191 = vpop.xlane.xlu0 %190
    %v192 = vadd.f32 %v130, %v191
    %193 = vst.msk [vmem:[#allocation3] sm:$0x3] %vm128, %v192
    // Predicated region
    $region22: #{tpu_custom_call.1} parent=1 // pred_check
      %p194 = pneg %p49
    $region23: #{tpu_custom_call.1} parent=1 // pred_check_branch
      %196 = sbr.rel (%p194) target = $region25
    $region24: #{tpu_custom_call.1} parent=1 // pred_region
      %v197 = vld [vmem:[#allocation2] sm:$0x3]
      %198 = vst.msk [vmem:[%s2] sm:$0x3] %vm128, %v197
      %v199 = vld [vmem:[#allocation3] sm:$0x3]
      %200 = vst.msk [vmem:[%s3] sm:$0x3] %vm128, %v199
    $region25: #{tpu_custom_call.1} parent=1 // pred_fallthru
      _
    // Predicated region
    $region26: #{tpu_custom_call.1} parent=1 // pred_check
      _
    $region27: #{tpu_custom_call.1} parent=1 // pred_check_branch
      %202 = sbr.rel (0) target = $region29
    $region28: #{tpu_custom_call.1} parent=1 // pred_region
      _
    $region29: #{tpu_custom_call.1} parent=1 // pred_fallthru
      _
    // Predicated region
    $region30: #{tpu_custom_call.1} parent=1 // pred_check
      _
    $region31: #{tpu_custom_call.1} parent=1 // pred_check_branch
      %204 = sbr.rel (0) target = $region33
    $region32: #{tpu_custom_call.1} parent=1 // pred_region
      _
    $region33: #{tpu_custom_call.1} parent=1 // pred_fallthru
      _
    // Predicated region
    $region34: #{tpu_custom_call.1} parent=1 // pred_check
      _
    $region35: #{tpu_custom_call.1} parent=1 // pred_check_branch
      %206 = sbr.rel (0) target = $region37
    $region36: #{tpu_custom_call.1} parent=1 // pred_region
      _
    $region37: #{tpu_custom_call.1} parent=1 // pred_fallthru
      _
    // Predicated region
    $region38: #{tpu_custom_call.1} parent=1 // pred_check
      _
    $region39: #{tpu_custom_call.1} parent=1 // pred_check_branch
      %208 = sbr.rel (0) target = $region41
    $region40: #{tpu_custom_call.1} parent=1 // pred_region
      _
    $region41: #{tpu_custom_call.1} parent=1 // pred_fallthru
      _
    %209 = vsyncpa [#allocation5], 1
    %210 = vsyncpa [#allocation7], 1

</llo_original>
